<compile_context>
chip_gen: v7x
topology: tpu7x:2x2x1
jax: 0.10.0
libtpu: 0.0.40
codegen_flags: <defaults>
</compile_context>

<pallas_src>
import functools

import jax
import jax.numpy as jnp
from jax.experimental import pallas as pl
from jax.experimental.pallas import tpu as pltpu


def _round_up(v, m):
    return ((v + m - 1) // m) * m


def _pick_batch_tile(b_pad):
    # b_pad is already a multiple of 8, so at least one candidate divides it.
    for cand in (256, 128, 64, 32, 16, 8):
        if b_pad % cand == 0:
            return cand
    return b_pad


def _pick_seq_tile(t, tb, d_in, itemsize, budget=8 << 20):
    # Whole sequence per step if the x tile is comfortably small; otherwise the
    # largest clean divisor of T from the ladder (keeps the (8,128) rule: either
    # a multiple of 8 or the full extent).
    if tb * t * d_in * itemsize <= budget:
        return t
    for cand in (1024, 512, 256, 128, 64, 32, 16, 8):
        if t % cand == 0:
            return cand
    return t


def mlp_kernel(x_ref, w1_ref, b1_ref, w2_ref, b2_ref, o_ref, xsum_ref, *, inv_t):
    # x_ref:    (TB, T_TILE, D_in)
    # w1_ref:   (D_in, H_pad)       b1_ref: (1, H_pad)
    # w2_ref:   (H_pad, D_out_pad)  b2_ref: (1, D_out_pad)
    # o_ref:    (TB, D_out_pad)
    # xsum_ref: (TB, D_in) f32 scratch (running sum over the sequence axis)
    t = pl.program_id(1)

    @pl.when(t == 0)
    def _():
        xsum_ref[...] = jnp.zeros_like(xsum_ref)

    # Partial sum over this sequence tile, accumulated in f32 regardless of the
    # input dtype (keeps bf16 inputs numerically safe).
    xsum_ref[...] += jnp.sum(x_ref[...].astype(jnp.float32), axis=1)

    @pl.when(t == pl.num_programs(1) - 1)
    def _():
        # mean = sum * (1/T): one VPU multiply on the reduced (TB, D_in) tensor.
        xm = xsum_ref[...] * inv_t

        # l1: Linear + ReLU (MXU inputs in the weights' native dtype, f32 acc).
        h = jnp.dot(
            xm.astype(w1_ref.dtype), w1_ref[...],
            preferred_element_type=jnp.float32,
        ) + b1_ref[...].astype(jnp.float32)
        h = jnp.maximum(h, 0.0)

        # dropout(p=0.3): inference-mode identity (matches module.eval()).
        # TODO(synk): training-mode stochastic dropout would use pltpu.prng_random_bits.

        # l2: Linear.
        y = jnp.dot(
            h.astype(w2_ref.dtype), w2_ref[...],
            preferred_element_type=jnp.float32,
        ) + b2_ref[...].astype(jnp.float32)
        o_ref[...] = y.astype(o_ref.dtype)


def mlp_forward(x, w1, b1, w2, b2):
    B, T, D_in = x.shape
    H = w1.shape[1]
    D_out = w2.shape[1]

    # --- pad to hardware-friendly tiles (lane-dense outputs / full MXU tiles) ---
    B_pad = _round_up(max(B, 1), 8)
    H_pad = _round_up(H, 128)
    D_out_pad = _round_up(D_out, 128)

    x_p = jnp.pad(x, ((0, B_pad - B), (0, 0), (0, 0)))
    w1_p = jnp.pad(w1, ((0, 0), (0, H_pad - H)))
    b1_p = jnp.pad(b1, ((0, 0), (0, H_pad - H)))
    w2_p = jnp.pad(w2, ((0, H_pad - H), (0, D_out_pad - D_out)))
    b2_p = jnp.pad(b2, ((0, 0), (0, D_out_pad - D_out)))

    # --- tile selection ---
    x_itemsize = jnp.dtype(x.dtype).itemsize
    w_itemsize = jnp.dtype(w1_p.dtype).itemsize
    TB = _pick_batch_tile(B_pad)
    T_TILE = _pick_seq_tile(T, TB, D_in, x_itemsize)
    grid = (B_pad // TB, T // T_TILE if T % T_TILE == 0 else 1)
    if T % T_TILE != 0:
        T_TILE = T  # full-extent fallback (legal block shape)

    # --- VMEM budget (double-buffered inputs + output + scratch), with headroom,
    #     capped below v7x's 64 MiB per-TC VMEM ---
    x_tile_bytes = TB * T_TILE * D_in * x_itemsize
    w_bytes = (D_in * H_pad + H_pad * D_out_pad + H_pad + D_out_pad) * w_itemsize
    out_tile_bytes = TB * D_out_pad * x_itemsize
    scratch_bytes = TB * D_in * 4
    needed = 2 * x_tile_bytes + 2 * w_bytes + 2 * out_tile_bytes + scratch_bytes
    vmem_limit = int(min(max(2 * needed, 8 << 20), 48 << 20))

    cost = pl.CostEstimate(
        flops=int(2 * B_pad * (D_in * H_pad + H_pad * D_out_pad) + B_pad * T * D_in),
        transcendentals=0,
        bytes_accessed=int(
            B_pad * T * D_in * x_itemsize
            + (D_in * H_pad + H_pad * D_out_pad + H_pad + D_out_pad) * w_itemsize
            + B_pad * D_out_pad * x_itemsize
        ),
    )

    kernel = functools.partial(mlp_kernel, inv_t=float(1.0 / T))

    out_p = pl.pallas_call(
        kernel,
        out_shape=jax.ShapeDtypeStruct((B_pad, D_out_pad), x.dtype),
        grid_spec=pltpu.PrefetchScalarGridSpec(
            num_scalar_prefetch=0,
            grid=grid,
            in_specs=[
                # x streams per (batch tile, seq tile); weights stay resident.
                pl.BlockSpec((TB, T_TILE, D_in), lambda i, t: (i, t, 0)),
                pl.BlockSpec((D_in, H_pad), lambda i, t: (0, 0)),
                pl.BlockSpec((1, H_pad), lambda i, t: (0, 0)),
                pl.BlockSpec((H_pad, D_out_pad), lambda i, t: (0, 0)),
                pl.BlockSpec((1, D_out_pad), lambda i, t: (0, 0)),
            ],
            out_specs=pl.BlockSpec((TB, D_out_pad), lambda i, t: (i, 0)),
            scratch_shapes=[pltpu.VMEM((TB, D_in), jnp.float32)],
        ),
        compiler_params=pltpu.CompilerParams(
            dimension_semantics=("parallel", "arbitrary"),
            vmem_limit_bytes=vmem_limit,
        ),
        cost_estimate=cost,
    )(x_p, w1_p, b1_p, w2_p, b2_p)

    return out_p[:B, :D_out]


def init_params(key, in_size, hidden_size, out_size, dtype=jnp.float32):
    """Deterministic init mimicking nn.Linear's uniform(-1/sqrt(fan_in), +)."""
    k1, k2, k3, k4 = jax.random.split(key, 4)
    bound1 = 1.0 / (in_size ** 0.5)
    bound2 = 1.0 / (hidden_size ** 0.5)
    # Stored as (in, out) == transpose of PyTorch's (out, in) weight.
    w1 = jax.random.uniform(k1, (in_size, hidden_size), dtype, -bound1, bound1)
    b1 = jax.random.uniform(k2, (1, hidden_size), dtype, -bound1, bound1)
    w2 = jax.random.uniform(k3, (hidden_size, out_size), dtype, -bound2, bound2)
    b2 = jax.random.uniform(k4, (1, out_size), dtype, -bound2, bound2)
    return w1, b1, w2, b2


if __name__ == "__main__":
    B, T = 2, 8            # batch, sequence length (reduced by mean over dim=1)
    in_size, hidden_size, out_size = 32, 32, 16

    key = jax.random.PRNGKey(0)
    kx, kp = jax.random.split(key)
    x = jax.random.normal(kx, (B, T, in_size), dtype=jnp.float32)
    w1, b1, w2, b2 = init_params(kp, in_size, hidden_size, out_size)

    out = mlp_forward(x, w1, b1, w2, b2)
    out = jax.block_until_ready(out)

    # Reference check in plain JAX (eval-mode dropout == identity).
    ref = jnp.maximum(jnp.mean(x, axis=1) @ w1 + b1, 0.0) @ w2 + b2
    assert out.shape == (B, out_size)
    assert jnp.allclose(out, ref, atol=1e-5, rtol=1e-5)

    print("KERNEL_OK")
</pallas_src>

<mosaic_0001>
module attributes {stable_mosaic.version = 11 : i64} {
  func.func @mlp_kernel(%arg0: i32, %arg1: i32, %arg2: memref<8x8x32xf32, #tpu.memory_space<vmem>>, %arg3: memref<32x128xf32, #tpu.memory_space<vmem>>, %arg4: memref<1x128xf32, #tpu.memory_space<vmem>>, %arg5: memref<128x128xf32, #tpu.memory_space<vmem>>, %arg6: memref<1x128xf32, #tpu.memory_space<vmem>>, %arg7: memref<8x128xf32, #tpu.memory_space<vmem>>, %arg8: memref<8x32xf32, #tpu.memory_space<vmem>>) attributes {dimension_semantics = [#tpu.dimension_semantics<parallel>, #tpu.dimension_semantics<arbitrary>], iteration_bounds = array<i64: 1, 1>, scalar_prefetch = 0 : i64, scratch_operands = 1 : i64, tpu.core_type = #tpu.core_type<tc>, window_params = [{transform_indices = @transform_0, window_bounds = array<i64: 8, 8, 32>}, {pipeline_mode = #tpu.pipeline_mode<synchronous>, transform_indices = @transform_1, window_bounds = array<i64: 32, 128>}, {pipeline_mode = #tpu.pipeline_mode<synchronous>, transform_indices = @transform_2, window_bounds = array<i64: 1, 128>}, {pipeline_mode = #tpu.pipeline_mode<synchronous>, transform_indices = @transform_3, window_bounds = array<i64: 128, 128>}, {pipeline_mode = #tpu.pipeline_mode<synchronous>, transform_indices = @transform_4, window_bounds = array<i64: 1, 128>}, {transform_indices = @transform_5, window_bounds = array<i64: 8, 128>}]} {
    %c0_i32 = arith.constant 0 : i32
    %0 = arith.cmpi eq, %arg1, %c0_i32 : i32
    %1 = arith.extui %0 : i1 to i32
    %c0_i32_0 = arith.constant 0 : i32
    %2 = arith.cmpi ne, %1, %c0_i32_0 : i32
    scf.if %2 {
      %cst_9 = arith.constant 0.000000e+00 : f32
      %11 = vector.broadcast %cst_9 : f32 to vector<8x32xf32>
      %c0_10 = arith.constant 0 : index
      %c0_11 = arith.constant 0 : index
      %12 = vector.load %arg8[%c0_10, %c0_11] : memref<8x32xf32, #tpu.memory_space<vmem>>, vector<8x32xf32>
      tpu.vector_store %arg8[%c0_10, %c0_11], %11 {strides = array<i32>} : memref<8x32xf32, #tpu.memory_space<vmem>>, vector<8x32xf32>,
    } else {
    }
    %c0 = arith.constant 0 : index
    %c0_1 = arith.constant 0 : index
    %3 = vector.load %arg8[%c0, %c0_1] : memref<8x32xf32, #tpu.memory_space<vmem>>, vector<8x32xf32>
    %c0_2 = arith.constant 0 : index
    %c0_3 = arith.constant 0 : index
    %c0_4 = arith.constant 0 : index
    %4 = vector.load %arg2[%c0_2, %c0_3, %c0_4] : memref<8x8x32xf32, #tpu.memory_space<vmem>>, vector<8x8x32xf32>
    %cst = arith.constant dense<0.000000e+00> : vector<8x32xf32>
    %5 = vector.multi_reduction <add>, %4, %cst [1] : vector<8x8x32xf32> to vector<8x32xf32>
    %6 = arith.addf %3, %5 : vector<8x32xf32>
    %c0_5 = arith.constant 0 : index
    %c0_6 = arith.constant 0 : index
    %7 = vector.load %arg8[%c0_5, %c0_6] : memref<8x32xf32, #tpu.memory_space<vmem>>, vector<8x32xf32>
    tpu.vector_store %arg8[%c0_5, %c0_6], %6 {strides = array<i32>} : memref<8x32xf32, #tpu.memory_space<vmem>>, vector<8x32xf32>,
    %c0_i32_7 = arith.constant 0 : i32
    %8 = arith.cmpi eq, %arg1, %c0_i32_7 : i32
    %9 = arith.extui %8 : i1 to i32
    %c0_i32_8 = arith.constant 0 : i32
    %10 = arith.cmpi ne, %9, %c0_i32_8 : i32
    scf.if %10 {
      %c0_9 = arith.constant 0 : index
      %c0_10 = arith.constant 0 : index
      %11 = vector.load %arg8[%c0_9, %c0_10] : memref<8x32xf32, #tpu.memory_space<vmem>>, vector<8x32xf32>
      %cst_11 = arith.constant 1.250000e-01 : f32
      %12 = vector.broadcast %cst_11 : f32 to vector<8x32xf32>
      %13 = arith.mulf %11, %12 : vector<8x32xf32>
      %c0_12 = arith.constant 0 : index
      %c0_13 = arith.constant 0 : index
      %14 = vector.load %arg3[%c0_12, %c0_13] : memref<32x128xf32, #tpu.memory_space<vmem>>, vector<32x128xf32>
      %cst_14 = arith.constant dense<0.000000e+00> : vector<8x128xf32>
      %15 = tpu.matmul %13, %14, %cst_14 {dimension_numbers = #tpu.dot_dimension_numbers<[1], [0], [0], [1], [0, 0, 1, 1], [], []>} : vector<8x32xf32>, vector<32x128xf32>, vector<8x128xf32> -> vector<8x128xf32>
      %c0_15 = arith.constant 0 : index
      %c0_16 = arith.constant 0 : index
      %16 = vector.load %arg4[%c0_15, %c0_16] : memref<1x128xf32, #tpu.memory_space<vmem>>, vector<1x128xf32>
      %17 = vector.broadcast %16 : vector<1x128xf32> to vector<8x128xf32>
      %18 = arith.addf %15, %17 : vector<8x128xf32>
      %cst_17 = arith.constant 0.000000e+00 : f32
      %19 = vector.broadcast %cst_17 : f32 to vector<8x128xf32>
      %20 = arith.maximumf %18, %19 : vector<8x128xf32>
      %c0_18 = arith.constant 0 : index
      %c0_19 = arith.constant 0 : index
      %21 = vector.load %arg5[%c0_18, %c0_19] : memref<128x128xf32, #tpu.memory_space<vmem>>, vector<128x128xf32>
      %cst_20 = arith.constant dense<0.000000e+00> : vector<8x128xf32>
      %22 = tpu.matmul %20, %21, %cst_20 {dimension_numbers = #tpu.dot_dimension_numbers<[1], [0], [0], [1], [0, 0, 1, 1], [], []>} : vector<8x128xf32>, vector<128x128xf32>, vector<8x128xf32> -> vector<8x128xf32>
      %c0_21 = arith.constant 0 : index
      %c0_22 = arith.constant 0 : index
      %23 = vector.load %arg6[%c0_21, %c0_22] : memref<1x128xf32, #tpu.memory_space<vmem>>, vector<1x128xf32>
      %24 = vector.broadcast %23 : vector<1x128xf32> to vector<8x128xf32>
      %25 = arith.addf %22, %24 : vector<8x128xf32>
      %c0_23 = arith.constant 0 : index
      %c0_24 = arith.constant 0 : index
      %26 = vector.load %arg7[%c0_23, %c0_24] : memref<8x128xf32, #tpu.memory_space<vmem>>, vector<8x128xf32>
      tpu.vector_store %arg7[%c0_23, %c0_24], %25 {strides = array<i32>} : memref<8x128xf32, #tpu.memory_space<vmem>>, vector<8x128xf32>,
    } else {
    }
    return
  }
  func.func @transform_0(%arg0: i32, %arg1: i32) -> (i32, i32, i32) {
    %c0_i32 = arith.constant 0 : i32
    %c0_i32_0 = arith.constant 0 : i32
    return %arg0, %arg1, %c0_i32 : i32, i32, i32
  }
  func.func @transform_1(%arg0: i32, %arg1: i32) -> (i32, i32) {
    %c0_i32 = arith.constant 0 : i32
    %c0_i32_0 = arith.constant 0 : i32
    %c0_i32_1 = arith.constant 0 : i32
    return %c0_i32, %c0_i32_0 : i32, i32
  }
  func.func @transform_2(%arg0: i32, %arg1: i32) -> (i32, i32) {
    %c0_i32 = arith.constant 0 : i32
    %c0_i32_0 = arith.constant 0 : i32
    %c0_i32_1 = arith.constant 0 : i32
    return %c0_i32, %c0_i32_0 : i32, i32
  }
  func.func @transform_3(%arg0: i32, %arg1: i32) -> (i32, i32) {
    %c0_i32 = arith.constant 0 : i32
    %c0_i32_0 = arith.constant 0 : i32
    %c0_i32_1 = arith.constant 0 : i32
    return %c0_i32, %c0_i32_0 : i32, i32
  }
  func.func @transform_4(%arg0: i32, %arg1: i32) -> (i32, i32) {
    %c0_i32 = arith.constant 0 : i32
    %c0_i32_0 = arith.constant 0 : i32
    %c0_i32_1 = arith.constant 0 : i32
    return %c0_i32, %c0_i32_0 : i32, i32
  }
  func.func @transform_5(%arg0: i32, %arg1: i32) -> (i32, i32) {
    %c0_i32 = arith.constant 0 : i32
    %c0_i32_0 = arith.constant 0 : i32
    return %arg0, %c0_i32 : i32, i32
  }
}

</mosaic_0001>

<llo_original>
// kernel: tpu_custom_call.1
$region0: #{tpu_custom_call.1}
  #allocation0 [shape = 'u32[]', space=smem, size = 0x4, offset = 0x4, fixed_abs, tag = 'smem constant byte address 0x4 - core index']
  #allocation1 [shape = 'u32[144,128]{1,0:T(1,128)}', space=vmem, size = 0x12000, scoped, tag = 'internal scratch']
  #allocation2 [shape = 'f32[8,32]{1,0:T(8,128)}', space=vmem, size = 0x1000, scoped, tag = 'scratch operand']
  %s0 = inlined_call_operand.hbm [shape: f32[8,8,32], index: 0, kind: input, shape index: {}]
  %s1 = inlined_call_operand.hbm [shape: f32[32,128], index: 1, kind: input, shape index: {}]
  %s2 = inlined_call_operand.vmem [shape: f32[1,128], index: 2, kind: input, shape index: {}]
  %s3 = inlined_call_operand.hbm [shape: f32[128,128], index: 3, kind: input, shape index: {}]
  %s4 = inlined_call_operand.vmem [shape: f32[1,128], index: 4, kind: input, shape index: {}]
  %s5 = inlined_call_operand.hbm [shape: f32[8,128], index: 5, kind: output, shape index: {}]
  %s6 = sld [smem:[#allocation0]]
  $region50: #{tpu_custom_call.1} parent=0
    _
  %s8 = ssub.s32 1, %s6
  %s9 = scalar_select 0, %s8, %s6
  $region1: #{tpu_custom_call.1} parent=0
    #allocation3 [shape = 'u8[32768]{0}', space=vmem, size = 0x8000, scoped, tag = 'input window, operand 0, single buffered']
    #allocation4 [shape = 's32[1]{0}', space=sflag, size = 0x4, scoped, tag = 'scoped memory for tpu_custom_call.1']
    #allocation5 [shape = 's32[1]{0}', space=sflag, size = 0x4, scoped, tag = 'scoped memory for tpu_custom_call.1']
    #allocation6 [shape = 'u8[16384]{0}', space=vmem, size = 0x4000, scoped, tag = 'input window, operand 1, single buffered']
    #allocation7 [shape = 's32[1]{0}', space=sflag, size = 0x4, scoped, tag = 'scoped memory for tpu_custom_call.1']
    #allocation8 [shape = 'u8[65536]{0}', space=vmem, size = 0x10000, scoped, tag = 'input window, operand 3, single buffered']
    #allocation9 [shape = 'u8[4096]{0}', space=vmem, size = 0x1000, scoped, tag = 'output window, operand 0, single buffered']
    %10 = vsyncpa [#allocation4], 0
    %11 = vsyncpa [#allocation7], 0
    %12 = vsyncpa [#allocation5], 0
    // Predicated region
    $region2: #{tpu_custom_call.1} parent=1 // pred_check
      _
    $region3: #{tpu_custom_call.1} parent=1 // pred_check_branch
      %14 = sbr.rel (0) target = $region5
    $region4: #{tpu_custom_call.1} parent=1 // pred_region
      %s16 = ssub.s32 1024, 1024
      %17 = vsyncadd [#allocation4], %s16
      %s18 = sshll.u32 [#allocation3], 4
      %s19 = int_to_ptr.vmem [resolvable:$true] %s18
      %24 = dma.hbm_to_vmem [thread:$0]  %s0, 1024, %s19, [#allocation4], 128, 128, 8
    $region5: #{tpu_custom_call.1} parent=1 // pred_fallthru
      _
    // Predicated region
    $region6: #{tpu_custom_call.1} parent=1 // pred_check
      _
    $region7: #{tpu_custom_call.1} parent=1 // pred_check_branch
      %26 = sbr.rel (0) target = $region9
    $region8: #{tpu_custom_call.1} parent=1 // pred_region
      %s28 = ssub.s32 512, 512
      %29 = vsyncadd [#allocation7], %s28
      %s30 = sshll.u32 [#allocation6], 4
      %s31 = int_to_ptr.vmem [resolvable:$true] %s30
      %36 = dma.hbm_to_vmem [thread:$0]  %s1, 512, %s31, [#allocation7], 128, 128, 8
    $region9: #{tpu_custom_call.1} parent=1 // pred_fallthru
      _
    // Predicated region
    $region10: #{tpu_custom_call.1} parent=1 // pred_check
      _
    $region11: #{tpu_custom_call.1} parent=1 // pred_check_branch
      %38 = sbr.rel (0) target = $region13
    $region12: #{tpu_custom_call.1} parent=1 // pred_region
      _
    $region13: #{tpu_custom_call.1} parent=1 // pred_fallthru
      _
    // Predicated region
    $region14: #{tpu_custom_call.1} parent=1 // pred_check
      _
    $region15: #{tpu_custom_call.1} parent=1 // pred_check_branch
      %40 = sbr.rel (0) target = $region17
    $region16: #{tpu_custom_call.1} parent=1 // pred_region
      %s42 = ssub.s32 2048, 2048
      %43 = vsyncadd [#allocation7], %s42
      %s44 = sshll.u32 [#allocation8], 4
      %s45 = int_to_ptr.vmem [resolvable:$true] %s44
      %50 = dma.hbm_to_vmem [thread:$0]  %s3, 2048, %s45, [#allocation7], 128, 128, 8
    $region17: #{tpu_custom_call.1} parent=1 // pred_fallthru
      _
    // Predicated region
    $region18: #{tpu_custom_call.1} parent=1 // pred_check
      _
    $region19: #{tpu_custom_call.1} parent=1 // pred_check_branch
      %52 = sbr.rel (0) target = $region21
    $region20: #{tpu_custom_call.1} parent=1 // pred_region
      _
    $region21: #{tpu_custom_call.1} parent=1 // pred_fallthru
      _
    // Predicated region
    $region22: #{tpu_custom_call.1} parent=1 // pred_check
      _
    $region23: #{tpu_custom_call.1} parent=1 // pred_check_branch
      %54 = sbr.rel (0) target = $region25
    $region24: #{tpu_custom_call.1} parent=1 // pred_region
      %55 = dma.done [#allocation4], 1024
    $region25: #{tpu_custom_call.1} parent=1 // pred_fallthru
      _
    // Predicated region
    $region26: #{tpu_custom_call.1} parent=1 // pred_check
      _
    $region27: #{tpu_custom_call.1} parent=1 // pred_check_branch
      %57 = sbr.rel (0) target = $region29
    $region28: #{tpu_custom_call.1} parent=1 // pred_region
      %58 = dma.done [#allocation7], 512
    $region29: #{tpu_custom_call.1} parent=1 // pred_fallthru
      _
    // Predicated region
    $region30: #{tpu_custom_call.1} parent=1 // pred_check
      _
    $region31: #{tpu_custom_call.1} parent=1 // pred_check_branch
      %60 = sbr.rel (0) target = $region33
    $region32: #{tpu_custom_call.1} parent=1 // pred_region
      %61 = dma.done [#allocation7], 2048
    $region33: #{tpu_custom_call.1} parent=1 // pred_fallthru
      _
    %p62 = scmp.eq.s32.totalorder 0, 0
    // Predicated region
    $region34: #{tpu_custom_call.1} parent=1 // pred_check
      %p63 = pneg %p62
    $region35: #{tpu_custom_call.1} parent=1 // pred_check_branch
      %65 = sbr.rel (%p63) target = $region37
    $region36: #{tpu_custom_call.1} parent=1 // pred_region
      %vm66 = vcmask 261120
      %67 = vst.msk [vmem:[#allocation2] sm:$0xff] %vm66, 0.0
    $region37: #{tpu_custom_call.1} parent=1 // pred_fallthru
      _
    %v68 = vld [vmem:[#allocation2] sm:$0xff]
    %v69 = vld [vmem:[#allocation3] sm:$0xff]
    %v70 = vld [vmem:[#allocation3 + $0x8] sm:$0xff]
    %v71 = vld [vmem:[#allocation3 + $0x10] sm:$0xff]
    %v72 = vld [vmem:[#allocation3 + $0x18] sm:$0xff]
    %v73 = vld [vmem:[#allocation3 + $0x20] sm:$0xff]
    %v74 = vld [vmem:[#allocation3 + $0x28] sm:$0xff]
    %v75 = vld [vmem:[#allocation3 + $0x30] sm:$0xff]
    %v76 = vld [vmem:[#allocation3 + $0x38] sm:$0xff]
    %vm77 = vcmask 261120
    %v78 = vsel %vm77, %v69, 0.0
    %v79 = vrot.slane %v78, 4
    %v80 = vadd.f32 %v78, %v79
    %v81 = vrot.slane %v80, 2
    %v82 = vadd.f32 %v80, %v81
    %v83 = vrot.slane %v82, 1
    %v84 = vadd.f32 %v82, %v83
    %v85 = vsel %vm77, %v70, 0.0
    %v86 = vrot.slane %v85, 4
    %v87 = vadd.f32 %v85, %v86
    %v88 = vrot.slane %v87, 2
    %v89 = vadd.f32 %v87, %v88
    %v90 = vrot.slane %v89, 1
    %v91 = vadd.f32 %v89, %v90
    %v92 = vsel %vm77, %v71, 0.0
    %v93 = vrot.slane %v92, 4
    %v94 = vadd.f32 %v92, %v93
    %v95 = vrot.slane %v94, 2
    %v96 = vadd.f32 %v94, %v95
    %v97 = vrot.slane %v96, 1
    %v98 = vadd.f32 %v96, %v97
    %v99 = vsel %vm77, %v72, 0.0
    %v100 = vrot.slane %v99, 4
    %v101 = vadd.f32 %v99, %v100
    %v102 = vrot.slane %v101, 2
    %v103 = vadd.f32 %v101, %v102
    %v104 = vrot.slane %v103, 1
    %v105 = vadd.f32 %v103, %v104
    %v106 = vsel %vm77, %v73, 0.0
    %v107 = vrot.slane %v106, 4
    %v108 = vadd.f32 %v106, %v107
    %v109 = vrot.slane %v108, 2
    %v110 = vadd.f32 %v108, %v109
    %v111 = vrot.slane %v110, 1
    %v112 = vadd.f32 %v110, %v111
    %v113 = vsel %vm77, %v74, 0.0
    %v114 = vrot.slane %v113, 4
    %v115 = vadd.f32 %v113, %v114
    %v116 = vrot.slane %v115, 2
    %v117 = vadd.f32 %v115, %v116
    %v118 = vrot.slane %v117, 1
    %v119 = vadd.f32 %v117, %v118
    %v120 = vsel %vm77, %v75, 0.0
    %v121 = vrot.slane %v120, 4
    %v122 = vadd.f32 %v120, %v121
    %v123 = vrot.slane %v122, 2
    %v124 = vadd.f32 %v122, %v123
    %v125 = vrot.slane %v124, 1
    %v126 = vadd.f32 %v124, %v125
    %v127 = vsel %vm77, %v76, 0.0
    %v128 = vrot.slane %v127, 4
    %v129 = vadd.f32 %v127, %v128
    %v130 = vrot.slane %v129, 2
    %v131 = vadd.f32 %v129, %v130
    %v132 = vrot.slane %v131, 1
    %v133 = vadd.f32 %v131, %v132
    %vm142 = vcmask 1041409
    %v143 = vsel %vm142, %v91, %v84
    %vm144 = vcmask 1042434
    %v145 = vsel %vm144, %v98, %v143
    %vm146 = vcmask 1043459
    %v147 = vsel %vm146, %v105, %v145
    %vm148 = vcmask 1044484
    %v149 = vsel %vm148, %v112, %v147
    %vm150 = vcmask 1045509
    %v151 = vsel %vm150, %v119, %v149
    %vm152 = vcmask 1046534
    %v153 = vsel %vm152, %v126, %v151
    %vm154 = vcmask 1047559
    %v155 = vsel %vm154, %v133, %v153
    %v157 = vadd.f32 %v68, %v155
    %158 = vst.msk [vmem:[#allocation2] sm:$0xff] %vm77, %v157
    // Predicated region
    $region38: #{tpu_custom_call.1} parent=1 // pred_check
      %p159 = pneg %p62
    $region39: #{tpu_custom_call.1} parent=1 // pred_check_branch
      %161 = sbr.rel (%p159) target = $region41
    $region40: #{tpu_custom_call.1} parent=1 // pred_region
      %v162 = vld [vmem:[#allocation2] sm:$0xff]
      %v163 = vmul.f32 %v162, 0.125
      %v164 = vld [vmem:[#allocation6] sm:$0xff]
      %v165 = vld [vmem:[#allocation6 + $0x8] sm:$0xff]
      %v166 = vld [vmem:[#allocation6 + $0x10] sm:$0xff]
      %v167 = vld [vmem:[#allocation6 + $0x18] sm:$0xff]
      %v168 = vld [vmem:[%s2] sm:$0x1]
      %v170 = vlaneseq
      %v171 = vshrl.u32 %v170, 7
      %v172 = vsub.s32 0, %v171
      %v173 = vrot.slane %v168, %v172
      %v176 = vsel %vm77, %v163, 0
      %178 = vmatprep.subr.mxu0 0.0
      %179 = vmatpush1.msra.mxu0 %v164
      %180 = vmatprep.subr.mxu0 0.0
      %181 = vmatpush1.msra.mxu0 %v165
      %182 = vmatprep.subr.mxu0 0.0
      %183 = vmatpush1.msra.mxu0 %v166
      %184 = vmatprep.subr.mxu0 0.0
      %185 = vmatpush1.msra.mxu0 %v167
      %186 = vmatprep.subr.mxu0 0.0
      %187 = vmatpush1.msra.mxu0 0.0
      %188 = vmatprep.subr.mxu0 0.0
      %189 = vmatpush1.msra.mxu0 0.0
      %190 = vmatprep.subr.mxu0 0.0
      %191 = vmatpush1.msra.mxu0 0.0
      %192 = vmatprep.subr.mxu0 0.0
      %193 = vmatpush1.msra.mxu0 0.0
      %194 = vmatprep.subr.mxu0 0.0
      %195 = vmatpush1.msra.mxu0 0.0
      %196 = vmatprep.subr.mxu0 0.0
      %197 = vmatpush1.msra.mxu0 0.0
      %198 = vmatprep.subr.mxu0 0.0
      %199 = vmatpush1.msra.mxu0 0.0
      %200 = vmatprep.subr.mxu0 0.0
      %201 = vmatpush1.msra.mxu0 0.0
      %202 = vmatprep.subr.mxu0 0.0
      %203 = vmatpush1.msra.mxu0 0.0
      %204 = vmatprep.subr.mxu0 0.0
      %205 = vmatpush1.msra.mxu0 0.0
      %206 = vmatprep.subr.mxu0 0.0
      %207 = vmatpush1.msra.mxu0 0.0
      %208 = vmatprep.subr.mxu0 0.0
      %209 = vmatpush1.msra.mxu0 0.0
      %210 = vmatprep.subr.mxu0 0.0
      %211 = vmatpush1.msra.mxu0 0.0
      %212 = vmatprep.subr.mxu0 0.0
      %213 = vmatpush1.msra.mxu0 0.0
      %214 = vmatprep.subr.mxu0 0.0
      %215 = vmatpush1.msra.mxu0 0.0
      %216 = vmatprep.subr.mxu0 0.0
      %217 = vmatpush1.msra.mxu0 0.0
      %218 = vmatprep.subr.mxu0 0.0
      %219 = vmatpush1.msra.mxu0 0.0
      %220 = vmatprep.subr.mxu0 0.0
      %221 = vmatpush1.msra.mxu0 0.0
      %222 = vmatprep.subr.mxu0 0.0
      %223 = vmatpush1.msra.mxu0 0.0
      %224 = vmatprep.subr.mxu0 0.0
      %225 = vmatpush1.msra.mxu0 0.0
      %226 = vmatprep.subr.mxu0 0.0
      %227 = vmatpush1.msra.mxu0 0.0
      %228 = vmatprep.subr.mxu0 0.0
      %229 = vmatpush1.msra.mxu0 0.0
      %230 = vmatprep.subr.mxu0 0.0
      %231 = vmatpush1.msra.mxu0 0.0
      %232 = vmatprep.subr.mxu0 0.0
      %233 = vmatpush1.msra.mxu0 0.0
      %234 = vmatprep.subr.mxu0 0.0
      %235 = vmatpush1.msra.mxu0 0.0
      %236 = vmatprep.subr.mxu0 0.0
      %237 = vmatpush1.msra.mxu0 0.0
      %238 = vmatprep.subr.mxu0 0.0
      %239 = vmatpush1.msra.mxu0 0.0
      %240 = vmatprep.subr.mxu0 0.0
      %241 = vmatpush1.msra.mxu0 0.0
      %242 = vmatprep.mubr.f32.mxu0 0.0
      %243 = vmatmul.mubr.f32.gmra.mrb[0].mxu0 %v176
      %v244 = vpop.f32.mrb[0].mxu0
      %v245 = vadd.f32 %v173, %v244
      %v246 = vpop.f32.mrb[0].mxu0
      %247 = vdwg.mxu0
      %v248 = vmax.f32 %v245, 0.0
      %v249 = vld [vmem:[#allocation8] sm:$0xff]
      %v250 = vld [vmem:[#allocation8 + $0x8] sm:$0xff]
      %v251 = vld [vmem:[#allocation8 + $0x10] sm:$0xff]
      %v252 = vld [vmem:[#allocation8 + $0x18] sm:$0xff]
      %v253 = vld [vmem:[#allocation8 + $0x20] sm:$0xff]
      %v254 = vld [vmem:[#allocation8 + $0x28] sm:$0xff]
      %v255 = vld [vmem:[#allocation8 + $0x30] sm:$0xff]
      %v256 = vld [vmem:[#allocation8 + $0x38] sm:$0xff]
      %v257 = vld [vmem:[#allocation8 + $0x40] sm:$0xff]
      %v258 = vld [vmem:[#allocation8 + $0x48] sm:$0xff]
      %v259 = vld [vmem:[#allocation8 + $0x50] sm:$0xff]
      %v260 = vld [vmem:[#allocation8 + $0x58] sm:$0xff]
      %v261 = vld [vmem:[#allocation8 + $0x60] sm:$0xff]
      %v262 = vld [vmem:[#allocation8 + $0x68] sm:$0xff]
      %v263 = vld [vmem:[#allocation8 + $0x70] sm:$0xff]
      %v264 = vld [vmem:[#allocation8 + $0x78] sm:$0xff]
      %v265 = vld [vmem:[%s4] sm:$0x1]
      %v267 = vlaneseq
      %v268 = vshrl.u32 %v267, 7
      %v269 = vsub.s32 0, %v268
      %v270 = vrot.slane %v265, %v269
      %272 = vmatprep.subr.mxu0 0.0
      %273 = vmatpush1.msra.mxu0 %v249
      %274 = vmatprep.subr.mxu0 0.0
      %275 = vmatpush1.msra.mxu0 %v250
      %276 = vmatprep.subr.mxu0 0.0
      %277 = vmatpush1.msra.mxu0 %v251
      %278 = vmatprep.subr.mxu0 0.0
      %279 = vmatpush1.msra.mxu0 %v252
      %280 = vmatprep.subr.mxu0 0.0
      %281 = vmatpush1.msra.mxu0 %v253
      %282 = vmatprep.subr.mxu0 0.0
      %283 = vmatpush1.msra.mxu0 %v254
      %284 = vmatprep.subr.mxu0 0.0
      %285 = vmatpush1.msra.mxu0 %v255
      %286 = vmatprep.subr.mxu0 0.0
      %287 = vmatpush1.msra.mxu0 %v256
      %288 = vmatprep.subr.mxu0 0.0
      %289 = vmatpush1.msra.mxu0 %v257
      %290 = vmatprep.subr.mxu0 0.0
      %291 = vmatpush1.msra.mxu0 %v258
      %292 = vmatprep.subr.mxu0 0.0
      %293 = vmatpush1.msra.mxu0 %v259
      %294 = vmatprep.subr.mxu0 0.0
      %295 = vmatpush1.msra.mxu0 %v260
      %296 = vmatprep.subr.mxu0 0.0
      %297 = vmatpush1.msra.mxu0 %v261
      %298 = vmatprep.subr.mxu0 0.0
      %299 = vmatpush1.msra.mxu0 %v262
      %300 = vmatprep.subr.mxu0 0.0
      %301 = vmatpush1.msra.mxu0 %v263
      %302 = vmatprep.subr.mxu0 0.0
      %303 = vmatpush1.msra.mxu0 %v264
      %304 = vmatprep.subr.mxu0 0.0
      %305 = vmatpush1.msra.mxu0 0.0
      %306 = vmatprep.subr.mxu0 0.0
      %307 = vmatpush1.msra.mxu0 0.0
      %308 = vmatprep.subr.mxu0 0.0
      %309 = vmatpush1.msra.mxu0 0.0
      %310 = vmatprep.subr.mxu0 0.0
      %311 = vmatpush1.msra.mxu0 0.0
      %312 = vmatprep.subr.mxu0 0.0
      %313 = vmatpush1.msra.mxu0 0.0
      %314 = vmatprep.subr.mxu0 0.0
      %315 = vmatpush1.msra.mxu0 0.0
      %316 = vmatprep.subr.mxu0 0.0
      %317 = vmatpush1.msra.mxu0 0.0
      %318 = vmatprep.subr.mxu0 0.0
      %319 = vmatpush1.msra.mxu0 0.0
      %320 = vmatprep.subr.mxu0 0.0
      %321 = vmatpush1.msra.mxu0 0.0
      %322 = vmatprep.subr.mxu0 0.0
      %323 = vmatpush1.msra.mxu0 0.0
      %324 = vmatprep.subr.mxu0 0.0
      %325 = vmatpush1.msra.mxu0 0.0
      %326 = vmatprep.subr.mxu0 0.0
      %327 = vmatpush1.msra.mxu0 0.0
      %328 = vmatprep.subr.mxu0 0.0
      %329 = vmatpush1.msra.mxu0 0.0
      %330 = vmatprep.subr.mxu0 0.0
      %331 = vmatpush1.msra.mxu0 0.0
      %332 = vmatprep.subr.mxu0 0.0
      %333 = vmatpush1.msra.mxu0 0.0
      %334 = vmatprep.subr.mxu0 0.0
      %335 = vmatpush1.msra.mxu0 0.0
      %336 = vmatprep.mubr.f32.mxu0 0.0
      %337 = vmatmul.mubr.f32.gmra.mrb[0].mxu0 %v248
      %v338 = vpop.f32.mrb[0].mxu0
      %v339 = vadd.f32 %v270, %v338
      %v340 = vpop.f32.mrb[0].mxu0
      %341 = vdwg.mxu0
      %342 = vst [vmem:[#allocation9] sm:$0xff] %v339
    $region41: #{tpu_custom_call.1} parent=1 // pred_fallthru
      _
    // Predicated region
    $region42: #{tpu_custom_call.1} parent=1 // pred_check
      _
    $region43: #{tpu_custom_call.1} parent=1 // pred_check_branch
      %344 = sbr.rel (0) target = $region45
    $region44: #{tpu_custom_call.1} parent=1 // pred_region
      %s346 = ssub.s32 128, 128
      %347 = vsyncadd [#allocation5], %s346
      %s349 = sshll.u32 [#allocation9], 4
      %s350 = int_to_ptr.vmem [resolvable:$true] %s349
      %352 = dma.vmem_to_hbm [thread:$0]  %s350, 128, %s5, [#allocation5]
    $region45: #{tpu_custom_call.1} parent=1 // pred_fallthru
      _
    // Predicated region
    $region46: #{tpu_custom_call.1} parent=1 // pred_check
      _
    $region47: #{tpu_custom_call.1} parent=1 // pred_check_branch
      %354 = sbr.rel (0) target = $region49
    $region48: #{tpu_custom_call.1} parent=1 // pred_region
      %355 = dma.done [#allocation5], 128
    $region49: #{tpu_custom_call.1} parent=1 // pred_fallthru
      _
    %356 = vsyncpa [#allocation4], 1
    %357 = vsyncpa [#allocation7], 1
    %358 = vsyncpa [#allocation5], 1

</llo_original>
